<compile_context>
chip_gen: v7x
topology: tpu7x:2x2x1
jax: 0.10.0
libtpu: 0.0.40
codegen_flags: <defaults>
</compile_context>

<pallas_src>
import functools

import jax
import jax.numpy as jnp
from jax.experimental import pallas as pl
from jax.experimental.pallas import tpu as pltpu


def _round_up(x, m):
    return ((x + m - 1) // m) * m


def _ddpg_actor_kernel(x_ref, w1_ref, b1_ref, w2_ref, b2_ref, w3_ref, b3_ref,
                       out_ref):
    """Fused MLP tile: two hidden Linear+ReLU layers and a Linear+Tanh head.

    x_ref holds the f32 obs tile (cast to bf16 in-kernel); w*_ref are bf16,
    b*_ref are f32. Accumulation, bias add, ReLU and tanh run in f32 on the
    VPU/EUP. out_ref is a (bm, act_dim) f32 block (only real action columns).
    """
    x = x_ref[...].astype(jnp.bfloat16)  # in-kernel cast hides under the MXU

    # Hidden layer 1: Linear + ReLU (f32 accumulate, bf16 intermediate)
    h = jnp.dot(x, w1_ref[...], preferred_element_type=jnp.float32) + b1_ref[...]
    h = jnp.maximum(h, 0.0).astype(jnp.bfloat16)

    # Hidden layer 2: Linear + ReLU
    h = jnp.dot(h, w2_ref[...], preferred_element_type=jnp.float32) + b2_ref[...]
    h = jnp.maximum(h, 0.0).astype(jnp.bfloat16)

    # Output layer: Linear + Tanh, stored narrow (act_dim lanes only).
    a = jnp.dot(h, w3_ref[...], preferred_element_type=jnp.float32) + b3_ref[...]
    out_ref[...] = jnp.tanh(a).astype(out_ref.dtype)


def prepare_params(params):
    """One-time parameter prep (call once, reuse across forward calls).

    Casts weights to bf16 (MXU operands) and biases to f32 row vectors.
    Doing this per-call would re-run pure HBM copy passes inside the rollout
    loop, so it is hoisted here.
    """
    prepped = {}
    for i in (1, 2, 3):
        prepped[f"w{i}"] = jnp.asarray(params[f"w{i}"]).astype(jnp.bfloat16)
        prepped[f"b{i}"] = jnp.asarray(params[f"b{i}"]).reshape(1, -1).astype(
            jnp.float32)
    return prepped


@functools.partial(jax.jit, static_argnames=("block_m",))
def ddpg_actor_forward(obs, prepped, *, block_m=1024):
    """Fused DDPGActor forward pass via pallas_call.

    obs:     (batch, obs_dim) float32
    prepped: output of prepare_params() — w1 (obs,h1) bf16, b1 (1,h1) f32,
             w2 (h1,h2) bf16, b2 (1,h2) f32, w3 (h2,act) bf16, b3 (1,act) f32
    returns  (batch, act_dim) float32 actions in (-1, 1).
    """
    batch, obs_dim = obs.shape
    h1 = prepped["w1"].shape[1]
    h2 = prepped["w2"].shape[1]
    act_dim = prepped["w3"].shape[1]

    # ---- adaptive batch tiling --------------------------------------------
    # Big tiles amortize per-step overhead; keep >= 2 grid steps when batch
    # allows so the "parallel" axis can shard across both v7x TensorCores.
    # bm is a multiple of 8 (sublane) and batch is padded by at most a few
    # rows (never rounded up to a whole block_m).
    num_tiles = max(pl.cdiv(batch, block_m), min(2, pl.cdiv(batch, 8)))
    bm = _round_up(pl.cdiv(batch, num_tiles), 8)
    batch_pad = _round_up(batch, bm)
    grid = (batch_pad // bm,)

    x = obs
    if batch_pad != batch:
        x = jnp.pad(x, ((0, batch_pad - batch), (0, 0)))

    # ---- advisory cost estimate -------------------------------------------
    flops = 2 * batch_pad * (obs_dim * h1 + h1 * h2 + h2 * act_dim)
    bytes_accessed = (
        4 * batch_pad * obs_dim                        # obs (f32)
        + 2 * (obs_dim * h1 + h1 * h2 + h2 * act_dim)  # weights (bf16)
        + 4 * (h1 + h2 + act_dim)                      # biases (f32)
        + 4 * batch_pad * act_dim)                     # output (f32)
    cost = pl.CostEstimate(flops=flops,
                           transcendentals=batch_pad * act_dim,
                           bytes_accessed=bytes_accessed)

    # Weights/biases: full-array blocks, constant index_map -> DMA'd once and
    # kept resident in VMEM across grid steps.
    def resident(a):
        return pl.BlockSpec(a.shape, lambda i: (0,) * a.ndim)

    out = pl.pallas_call(
        _ddpg_actor_kernel,
        out_shape=jax.ShapeDtypeStruct((batch_pad, act_dim), jnp.float32),
        grid=grid,
        in_specs=[
            pl.BlockSpec((bm, obs_dim), lambda i: (i, 0)),
            resident(prepped["w1"]), resident(prepped["b1"]),
            resident(prepped["w2"]), resident(prepped["b2"]),
            resident(prepped["w3"]), resident(prepped["b3"]),
        ],
        out_specs=pl.BlockSpec((bm, act_dim), lambda i: (i, 0)),
        compiler_params=pltpu.CompilerParams(
            dimension_semantics=("parallel",),
            vmem_limit_bytes=48 * 1024 * 1024),
        cost_estimate=cost,
    )(x, prepped["w1"], prepped["b1"], prepped["w2"], prepped["b2"],
      prepped["w3"], prepped["b3"])

    if batch_pad != batch:
        out = out[:batch]
    return out


def init_params(key, obs_dim, act_dim, hidden_sizes=(256, 256)):
    """Deterministic PyTorch-style (uniform fan-in) init, weights stored (in, out)."""
    sizes = [obs_dim] + list(hidden_sizes) + [act_dim]
    params = {}
    for i, (fan_in, fan_out) in enumerate(zip(sizes[:-1], sizes[1:]), start=1):
        key, kw, kb = jax.random.split(key, 3)
        bound = 1.0 / jnp.sqrt(float(fan_in))
        params[f"w{i}"] = jax.random.uniform(
            kw, (fan_in, fan_out), jnp.float32, minval=-bound, maxval=bound)
        params[f"b{i}"] = jax.random.uniform(
            kb, (1, fan_out), jnp.float32, minval=-bound, maxval=bound)
    return params


def _reference_forward_f32(obs, params):
    """Pure-JAX f32 reference matching the PyTorch module."""
    h = jnp.maximum(obs @ params["w1"] + params["b1"], 0.0)
    h = jnp.maximum(h @ params["w2"] + params["b2"], 0.0)
    return jnp.tanh(h @ params["w3"] + params["b3"])


def _reference_forward_bf16(obs, params):
    """Pure-JAX reference using the same bf16-operand / f32-accumulate path."""
    bf = jnp.bfloat16
    h = jnp.dot(obs.astype(bf), params["w1"].astype(bf),
                preferred_element_type=jnp.float32) + params["b1"]
    h = jnp.maximum(h, 0.0).astype(bf)
    h = jnp.dot(h, params["w2"].astype(bf),
                preferred_element_type=jnp.float32) + params["b2"]
    h = jnp.maximum(h, 0.0).astype(bf)
    a = jnp.dot(h, params["w3"].astype(bf),
                preferred_element_type=jnp.float32) + params["b3"]
    return jnp.tanh(a)


if __name__ == "__main__":
    key = jax.random.PRNGKey(0)
    key, k_obs, k_params = jax.random.split(key, 3)

    batch, obs_dim, act_dim = 2, 16, 8
    hidden_sizes = (32, 32)  # small hidden sizes for the example run

    params = init_params(k_params, obs_dim, act_dim, hidden_sizes)
    prepped = prepare_params(params)
    obs = jax.random.normal(k_obs, (batch, obs_dim), dtype=jnp.float32)

    action = ddpg_actor_forward(obs, prepped)
    action = jax.block_until_ready(action)

    assert action.shape == (batch, act_dim)

    ref_bf16 = _reference_forward_bf16(obs, params)
    assert jnp.allclose(action, ref_bf16, atol=1e-3, rtol=1e-3), \
        "mismatch vs bf16-matched reference"

    ref_f32 = _reference_forward_f32(obs, params)
    assert jnp.allclose(action, ref_f32, atol=3e-2, rtol=3e-2), \
        "mismatch vs f32 reference"

    print("KERNEL_OK")
</pallas_src>

<mosaic_0001>
module attributes {stable_mosaic.version = 11 : i64} {
  func.func @_ddpg_actor_kernel(%arg0: i32, %arg1: memref<8x16xf32, #tpu.memory_space<vmem>>, %arg2: memref<16x32xbf16, #tpu.memory_space<vmem>>, %arg3: memref<1x32xf32, #tpu.memory_space<vmem>>, %arg4: memref<32x32xbf16, #tpu.memory_space<vmem>>, %arg5: memref<1x32xf32, #tpu.memory_space<vmem>>, %arg6: memref<32x8xbf16, #tpu.memory_space<vmem>>, %arg7: memref<1x8xf32, #tpu.memory_space<vmem>>, %arg8: memref<8x8xf32, #tpu.memory_space<vmem>>) attributes {dimension_semantics = [#tpu.dimension_semantics<parallel>], iteration_bounds = array<i64: 1>, scalar_prefetch = 0 : i64, scratch_operands = 0 : i64, tpu.core_type = #tpu.core_type<tc>, window_params = [{transform_indices = @transform_0, window_bounds = array<i64: 8, 16>}, {pipeline_mode = #tpu.pipeline_mode<synchronous>, transform_indices = @transform_1, window_bounds = array<i64: 16, 32>}, {pipeline_mode = #tpu.pipeline_mode<synchronous>, transform_indices = @transform_2, window_bounds = array<i64: 1, 32>}, {pipeline_mode = #tpu.pipeline_mode<synchronous>, transform_indices = @transform_3, window_bounds = array<i64: 32, 32>}, {pipeline_mode = #tpu.pipeline_mode<synchronous>, transform_indices = @transform_4, window_bounds = array<i64: 1, 32>}, {pipeline_mode = #tpu.pipeline_mode<synchronous>, transform_indices = @transform_5, window_bounds = array<i64: 32, 8>}, {pipeline_mode = #tpu.pipeline_mode<synchronous>, transform_indices = @transform_6, window_bounds = array<i64: 1, 8>}, {transform_indices = @transform_7, window_bounds = array<i64: 8, 8>}]} {
    %c0 = arith.constant 0 : index
    %c0_0 = arith.constant 0 : index
    %0 = vector.load %arg1[%c0, %c0_0] : memref<8x16xf32, #tpu.memory_space<vmem>>, vector<8x16xf32>
    %1 = arith.truncf %0 : vector<8x16xf32> to vector<8x16xbf16>
    %c0_1 = arith.constant 0 : index
    %c0_2 = arith.constant 0 : index
    %2 = vector.load %arg2[%c0_1, %c0_2] : memref<16x32xbf16, #tpu.memory_space<vmem>>, vector<16x32xbf16>
    %cst = arith.constant dense<0.000000e+00> : vector<8x32xf32>
    %3 = tpu.matmul %1, %2, %cst {dimension_numbers = #tpu.dot_dimension_numbers<[1], [0], [0], [1], [0, 0, 1, 1], [], []>} : vector<8x16xbf16>, vector<16x32xbf16>, vector<8x32xf32> -> vector<8x32xf32>
    %c0_3 = arith.constant 0 : index
    %c0_4 = arith.constant 0 : index
    %4 = vector.load %arg3[%c0_3, %c0_4] : memref<1x32xf32, #tpu.memory_space<vmem>>, vector<1x32xf32>
    %5 = vector.broadcast %4 : vector<1x32xf32> to vector<8x32xf32>
    %6 = arith.addf %3, %5 : vector<8x32xf32>
    %cst_5 = arith.constant 0.000000e+00 : f32
    %7 = vector.broadcast %cst_5 : f32 to vector<8x32xf32>
    %8 = arith.maximumf %6, %7 : vector<8x32xf32>
    %9 = arith.truncf %8 : vector<8x32xf32> to vector<8x32xbf16>
    %c0_6 = arith.constant 0 : index
    %c0_7 = arith.constant 0 : index
    %10 = vector.load %arg4[%c0_6, %c0_7] : memref<32x32xbf16, #tpu.memory_space<vmem>>, vector<32x32xbf16>
    %cst_8 = arith.constant dense<0.000000e+00> : vector<8x32xf32>
    %11 = tpu.matmul %9, %10, %cst_8 {dimension_numbers = #tpu.dot_dimension_numbers<[1], [0], [0], [1], [0, 0, 1, 1], [], []>} : vector<8x32xbf16>, vector<32x32xbf16>, vector<8x32xf32> -> vector<8x32xf32>
    %c0_9 = arith.constant 0 : index
    %c0_10 = arith.constant 0 : index
    %12 = vector.load %arg5[%c0_9, %c0_10] : memref<1x32xf32, #tpu.memory_space<vmem>>, vector<1x32xf32>
    %13 = vector.broadcast %12 : vector<1x32xf32> to vector<8x32xf32>
    %14 = arith.addf %11, %13 : vector<8x32xf32>
    %cst_11 = arith.constant 0.000000e+00 : f32
    %15 = vector.broadcast %cst_11 : f32 to vector<8x32xf32>
    %16 = arith.maximumf %14, %15 : vector<8x32xf32>
    %17 = arith.truncf %16 : vector<8x32xf32> to vector<8x32xbf16>
    %c0_12 = arith.constant 0 : index
    %c0_13 = arith.constant 0 : index
    %18 = vector.load %arg6[%c0_12, %c0_13] : memref<32x8xbf16, #tpu.memory_space<vmem>>, vector<32x8xbf16>
    %cst_14 = arith.constant dense<0.000000e+00> : vector<8x8xf32>
    %19 = tpu.matmul %17, %18, %cst_14 {dimension_numbers = #tpu.dot_dimension_numbers<[1], [0], [0], [1], [0, 0, 1, 1], [], []>} : vector<8x32xbf16>, vector<32x8xbf16>, vector<8x8xf32> -> vector<8x8xf32>
    %c0_15 = arith.constant 0 : index
    %c0_16 = arith.constant 0 : index
    %20 = vector.load %arg7[%c0_15, %c0_16] : memref<1x8xf32, #tpu.memory_space<vmem>>, vector<1x8xf32>
    %21 = vector.broadcast %20 : vector<1x8xf32> to vector<8x8xf32>
    %22 = arith.addf %19, %21 : vector<8x8xf32>
    %23 = math.tanh %22 : vector<8x8xf32>
    %c0_17 = arith.constant 0 : index
    %c0_18 = arith.constant 0 : index
    %24 = vector.load %arg8[%c0_17, %c0_18] : memref<8x8xf32, #tpu.memory_space<vmem>>, vector<8x8xf32>
    tpu.vector_store %arg8[%c0_17, %c0_18], %23 {strides = array<i32>} : memref<8x8xf32, #tpu.memory_space<vmem>>, vector<8x8xf32>,
    return
  }
  func.func @transform_0(%arg0: i32) -> (i32, i32) {
    %c0_i32 = arith.constant 0 : i32
    %c0_i32_0 = arith.constant 0 : i32
    return %arg0, %c0_i32 : i32, i32
  }
  func.func @transform_1(%arg0: i32) -> (i32, i32) {
    %c0_i32 = arith.constant 0 : i32
    %c0_i32_0 = arith.constant 0 : i32
    %c0_i32_1 = arith.constant 0 : i32
    return %c0_i32, %c0_i32_0 : i32, i32
  }
  func.func @transform_2(%arg0: i32) -> (i32, i32) {
    %c0_i32 = arith.constant 0 : i32
    %c0_i32_0 = arith.constant 0 : i32
    %c0_i32_1 = arith.constant 0 : i32
    return %c0_i32, %c0_i32_0 : i32, i32
  }
  func.func @transform_3(%arg0: i32) -> (i32, i32) {
    %c0_i32 = arith.constant 0 : i32
    %c0_i32_0 = arith.constant 0 : i32
    %c0_i32_1 = arith.constant 0 : i32
    return %c0_i32, %c0_i32_0 : i32, i32
  }
  func.func @transform_4(%arg0: i32) -> (i32, i32) {
    %c0_i32 = arith.constant 0 : i32
    %c0_i32_0 = arith.constant 0 : i32
    %c0_i32_1 = arith.constant 0 : i32
    return %c0_i32, %c0_i32_0 : i32, i32
  }
  func.func @transform_5(%arg0: i32) -> (i32, i32) {
    %c0_i32 = arith.constant 0 : i32
    %c0_i32_0 = arith.constant 0 : i32
    %c0_i32_1 = arith.constant 0 : i32
    return %c0_i32, %c0_i32_0 : i32, i32
  }
  func.func @transform_6(%arg0: i32) -> (i32, i32) {
    %c0_i32 = arith.constant 0 : i32
    %c0_i32_0 = arith.constant 0 : i32
    %c0_i32_1 = arith.constant 0 : i32
    return %c0_i32, %c0_i32_0 : i32, i32
  }
  func.func @transform_7(%arg0: i32) -> (i32, i32) {
    %c0_i32 = arith.constant 0 : i32
    %c0_i32_0 = arith.constant 0 : i32
    return %arg0, %c0_i32 : i32, i32
  }
}

</mosaic_0001>

<llo_original>
// kernel: ddpg_actor_forward.1
$region0: #{ddpg_actor_forward.1}
  #allocation0 [shape = 'u32[]', space=smem, size = 0x4, offset = 0x4, fixed_abs, tag = 'smem constant byte address 0x4 - core index']
  #allocation1 [shape = 'u32[144,128]{1,0:T(1,128)}', space=vmem, size = 0x12000, scoped, tag = 'internal scratch']
  %s0 = inlined_call_operand.vmem [shape: f32[8,16], index: 0, kind: input, shape index: {}]
  %s1 = inlined_call_operand.vmem [shape: bf16[16,32], index: 1, kind: input, shape index: {}]
  %s2 = inlined_call_operand.vmem [shape: f32[1,32], index: 2, kind: input, shape index: {}]
  %s3 = inlined_call_operand.vmem [shape: bf16[32,32], index: 3, kind: input, shape index: {}]
  %s4 = inlined_call_operand.vmem [shape: f32[1,32], index: 4, kind: input, shape index: {}]
  %s5 = inlined_call_operand.vmem [shape: bf16[32,8], index: 5, kind: input, shape index: {}]
  %s6 = inlined_call_operand.vmem [shape: f32[1,8], index: 6, kind: input, shape index: {}]
  %s7 = inlined_call_operand.vmem [shape: f32[8,8], index: 7, kind: output, shape index: {}]
  %s8 = sld [smem:[#allocation0]]
  $region38: #{ddpg_actor_forward.1} parent=0
    _
  %s10 = ssub.s32 1, %s8
  %s11 = scalar_select 0, %s10, %s8
  // Predicated region
  $region2: #{ddpg_actor_forward.1} parent=0 // pred_check
    _
  $region3: #{ddpg_actor_forward.1} parent=0 // pred_check_branch
    %13 = sbr.rel (0) target = $region5
  $region4: #{ddpg_actor_forward.1} parent=0 // pred_region
    _
  $region5: #{ddpg_actor_forward.1} parent=0 // pred_fallthru
    _
  // Predicated region
  $region6: #{ddpg_actor_forward.1} parent=0 // pred_check
    _
  $region7: #{ddpg_actor_forward.1} parent=0 // pred_check_branch
    %15 = sbr.rel (0) target = $region9
  $region8: #{ddpg_actor_forward.1} parent=0 // pred_region
    _
  $region9: #{ddpg_actor_forward.1} parent=0 // pred_fallthru
    _
  // Predicated region
  $region10: #{ddpg_actor_forward.1} parent=0 // pred_check
    _
  $region11: #{ddpg_actor_forward.1} parent=0 // pred_check_branch
    %17 = sbr.rel (0) target = $region13
  $region12: #{ddpg_actor_forward.1} parent=0 // pred_region
    _
  $region13: #{ddpg_actor_forward.1} parent=0 // pred_fallthru
    _
  // Predicated region
  $region14: #{ddpg_actor_forward.1} parent=0 // pred_check
    _
  $region15: #{ddpg_actor_forward.1} parent=0 // pred_check_branch
    %19 = sbr.rel (0) target = $region17
  $region16: #{ddpg_actor_forward.1} parent=0 // pred_region
    _
  $region17: #{ddpg_actor_forward.1} parent=0 // pred_fallthru
    _
  // Predicated region
  $region18: #{ddpg_actor_forward.1} parent=0 // pred_check
    _
  $region19: #{ddpg_actor_forward.1} parent=0 // pred_check_branch
    %21 = sbr.rel (0) target = $region21
  $region20: #{ddpg_actor_forward.1} parent=0 // pred_region
    _
  $region21: #{ddpg_actor_forward.1} parent=0 // pred_fallthru
    _
  // Predicated region
  $region22: #{ddpg_actor_forward.1} parent=0 // pred_check
    _
  $region23: #{ddpg_actor_forward.1} parent=0 // pred_check_branch
    %23 = sbr.rel (0) target = $region25
  $region24: #{ddpg_actor_forward.1} parent=0 // pred_region
    _
  $region25: #{ddpg_actor_forward.1} parent=0 // pred_fallthru
    _
  // Predicated region
  $region26: #{ddpg_actor_forward.1} parent=0 // pred_check
    _
  $region27: #{ddpg_actor_forward.1} parent=0 // pred_check_branch
    %25 = sbr.rel (0) target = $region29
  $region28: #{ddpg_actor_forward.1} parent=0 // pred_region
    _
  $region29: #{ddpg_actor_forward.1} parent=0 // pred_fallthru
    _
  %v27 = vld [vmem:[%s0] sm:$0xff]
  %v28 = vpack.c.bf16 %v27, %v27
  %v29 = vld [vmem:[%s1] sm:$0xf]
  %v30 = vld [vmem:[%s1 + $0x4] sm:$0xf]
  %v31 = vld [vmem:[%s2] sm:$0x1]
  %v33 = vlaneseq
  %v34 = vshrl.u32 %v33, 7
  %v35 = vsub.s32 0, %v34
  %v36 = vrot.slane %v31, %v35
  %v40 = vunpack.c.l.b16 %v29
  %v41 = vunpack.c.l.b16 %v30
  %v42 = vpack.c.b16 %v41, %v40
  %vm44 = vcmask 130048
  %v46 = vsel %vm44, %v28, 0
  %48 = vmatprep.subr.bf16.mxu0 0
  %49 = vmatpush1.bf16.msra.mxu0 %v42
  %50 = vmatprep.subr.bf16.mxu0 0
  %51 = vmatpush1.bf16.msra.mxu0 0
  %52 = vmatprep.subr.bf16.mxu0 0
  %53 = vmatpush1.bf16.msra.mxu0 0
  %54 = vmatprep.subr.bf16.mxu0 0
  %55 = vmatpush1.bf16.msra.mxu0 0
  %56 = vmatprep.subr.bf16.mxu0 0
  %57 = vmatpush1.bf16.msra.mxu0 0
  %58 = vmatprep.subr.bf16.mxu0 0
  %59 = vmatpush1.bf16.msra.mxu0 0
  %60 = vmatprep.subr.bf16.mxu0 0
  %61 = vmatpush1.bf16.msra.mxu0 0
  %62 = vmatprep.subr.bf16.mxu0 0
  %63 = vmatpush1.bf16.msra.mxu0 0
  %64 = vmatprep.subr.bf16.mxu0 0
  %65 = vmatpush1.bf16.msra.mxu0 0
  %66 = vmatprep.subr.bf16.mxu0 0
  %67 = vmatpush1.bf16.msra.mxu0 0
  %68 = vmatprep.subr.bf16.mxu0 0
  %69 = vmatpush1.bf16.msra.mxu0 0
  %70 = vmatprep.subr.bf16.mxu0 0
  %71 = vmatpush1.bf16.msra.mxu0 0
  %72 = vmatprep.subr.bf16.mxu0 0
  %73 = vmatpush1.bf16.msra.mxu0 0
  %74 = vmatprep.subr.bf16.mxu0 0
  %75 = vmatpush1.bf16.msra.mxu0 0
  %76 = vmatprep.subr.bf16.mxu0 0
  %77 = vmatpush1.bf16.msra.mxu0 0
  %78 = vmatprep.subr.bf16.mxu0 0
  %79 = vmatpush1.bf16.msra.mxu0 0
  %80 = vmatprep.mubr.bf16.mxu0 0
  %81 = vmatmul.mubr.bf16.gmra.mrb[0].mxu0 %v46
  %v82 = vpop.f32.mrb[0].mxu0
  %v83 = vadd.f32 %v36, %v82
  %v84 = vpop.f32.mrb[0].mxu0
  %v85 = vpop.f32.mrb[0].mxu0
  %v86 = vpop.f32.mrb[0].mxu0
  %87 = vdwg.mxu0
  %v88 = vmax.f32 %v83, 0.0
  %v89 = vpack.c.bf16 %v88, %v88
  %v90 = vld [vmem:[%s3] sm:$0xf]
  %v91 = vld [vmem:[%s3 + $0x4] sm:$0xf]
  %v92 = vld [vmem:[%s3 + $0x8] sm:$0xf]
  %v93 = vld [vmem:[%s3 + $0xc] sm:$0xf]
  %v94 = vld [vmem:[%s4] sm:$0x1]
  %v96 = vlaneseq
  %v97 = vshrl.u32 %v96, 7
  %v98 = vsub.s32 0, %v97
  %v99 = vrot.slane %v94, %v98
  %v105 = vunpack.c.l.b16 %v90
  %v106 = vunpack.c.l.b16 %v91
  %v107 = vunpack.c.l.b16 %v92
  %v108 = vunpack.c.l.b16 %v93
  %v109 = vpack.c.b16 %v106, %v105
  %v110 = vpack.c.b16 %v108, %v107
  %vm113 = vcmask 261120
  %v115 = vsel %vm113, %v89, 0
  %117 = vmatprep.subr.bf16.mxu0 0
  %118 = vmatpush1.bf16.msra.mxu0 %v109
  %119 = vmatprep.subr.bf16.mxu0 0
  %120 = vmatpush1.bf16.msra.mxu0 %v110
  %121 = vmatprep.subr.bf16.mxu0 0
  %122 = vmatpush1.bf16.msra.mxu0 0
  %123 = vmatprep.subr.bf16.mxu0 0
  %124 = vmatpush1.bf16.msra.mxu0 0
  %125 = vmatprep.subr.bf16.mxu0 0
  %126 = vmatpush1.bf16.msra.mxu0 0
  %127 = vmatprep.subr.bf16.mxu0 0
  %128 = vmatpush1.bf16.msra.mxu0 0
  %129 = vmatprep.subr.bf16.mxu0 0
  %130 = vmatpush1.bf16.msra.mxu0 0
  %131 = vmatprep.subr.bf16.mxu0 0
  %132 = vmatpush1.bf16.msra.mxu0 0
  %133 = vmatprep.subr.bf16.mxu0 0
  %134 = vmatpush1.bf16.msra.mxu0 0
  %135 = vmatprep.subr.bf16.mxu0 0
  %136 = vmatpush1.bf16.msra.mxu0 0
  %137 = vmatprep.subr.bf16.mxu0 0
  %138 = vmatpush1.bf16.msra.mxu0 0
  %139 = vmatprep.subr.bf16.mxu0 0
  %140 = vmatpush1.bf16.msra.mxu0 0
  %141 = vmatprep.subr.bf16.mxu0 0
  %142 = vmatpush1.bf16.msra.mxu0 0
  %143 = vmatprep.subr.bf16.mxu0 0
  %144 = vmatpush1.bf16.msra.mxu0 0
  %145 = vmatprep.subr.bf16.mxu0 0
  %146 = vmatpush1.bf16.msra.mxu0 0
  %147 = vmatprep.subr.bf16.mxu0 0
  %148 = vmatpush1.bf16.msra.mxu0 0
  %149 = vmatprep.mubr.bf16.mxu0 0
  %150 = vmatmul.mubr.bf16.gmra.mrb[0].mxu0 %v115
  %v151 = vpop.f32.mrb[0].mxu0
  %v152 = vadd.f32 %v99, %v151
  %v153 = vpop.f32.mrb[0].mxu0
  %v154 = vpop.f32.mrb[0].mxu0
  %v155 = vpop.f32.mrb[0].mxu0
  %156 = vdwg.mxu0
  %v157 = vmax.f32 %v152, 0.0
  %v158 = vpack.c.bf16 %v157, %v157
  %v159 = vld [vmem:[%s5] sm:$0xf]
  %v160 = vld [vmem:[%s5 + $0x4] sm:$0xf]
  %v161 = vld [vmem:[%s5 + $0x8] sm:$0xf]
  %v162 = vld [vmem:[%s5 + $0xc] sm:$0xf]
  %v163 = vld [vmem:[%s6] sm:$0x1]
  %v165 = vlaneseq
  %v166 = vshrl.u32 %v165, 7
  %v167 = vsub.s32 0, %v166
  %v168 = vrot.slane %v163, %v167
  %v174 = vunpack.c.l.b16 %v159
  %v175 = vunpack.c.l.b16 %v160
  %v176 = vunpack.c.l.b16 %v161
  %v177 = vunpack.c.l.b16 %v162
  %v178 = vpack.c.b16 %v175, %v174
  %v179 = vpack.c.b16 %v177, %v176
  %v183 = vsel %vm113, %v158, 0
  %185 = vmatprep.subr.bf16.mxu0 0
  %186 = vmatpush1.bf16.msra.mxu0 %v178
  %187 = vmatprep.subr.bf16.mxu0 0
  %188 = vmatpush1.bf16.msra.mxu0 %v179
  %189 = vmatprep.subr.bf16.mxu0 0
  %190 = vmatpush1.bf16.msra.mxu0 0
  %191 = vmatprep.subr.bf16.mxu0 0
  %192 = vmatpush1.bf16.msra.mxu0 0
  %193 = vmatprep.subr.bf16.mxu0 0
  %194 = vmatpush1.bf16.msra.mxu0 0
  %195 = vmatprep.subr.bf16.mxu0 0
  %196 = vmatpush1.bf16.msra.mxu0 0
  %197 = vmatprep.subr.bf16.mxu0 0
  %198 = vmatpush1.bf16.msra.mxu0 0
  %199 = vmatprep.subr.bf16.mxu0 0
  %200 = vmatpush1.bf16.msra.mxu0 0
  %201 = vmatprep.subr.bf16.mxu0 0
  %202 = vmatpush1.bf16.msra.mxu0 0
  %203 = vmatprep.subr.bf16.mxu0 0
  %204 = vmatpush1.bf16.msra.mxu0 0
  %205 = vmatprep.subr.bf16.mxu0 0
  %206 = vmatpush1.bf16.msra.mxu0 0
  %207 = vmatprep.subr.bf16.mxu0 0
  %208 = vmatpush1.bf16.msra.mxu0 0
  %209 = vmatprep.subr.bf16.mxu0 0
  %210 = vmatpush1.bf16.msra.mxu0 0
  %211 = vmatprep.subr.bf16.mxu0 0
  %212 = vmatpush1.bf16.msra.mxu0 0
  %213 = vmatprep.subr.bf16.mxu0 0
  %214 = vmatpush1.bf16.msra.mxu0 0
  %215 = vmatprep.subr.bf16.mxu0 0
  %216 = vmatpush1.bf16.msra.mxu0 0
  %217 = vmatprep.mubr.bf16.mxu0 0
  %218 = vmatmul.mubr.bf16.gmra.mrb[0].mxu0 %v183
  %v219 = vpop.f32.mrb[0].mxu0
  %v220 = vadd.f32 %v168, %v219
  %v221 = vpop.f32.mrb[0].mxu0
  %v222 = vpop.f32.mrb[0].mxu0
  %v223 = vpop.f32.mrb[0].mxu0
  %224 = vdwg.mxu0
  %v225 = vtanh.pop %v220
  %vm226 = vcmask 64512
  %227 = vst.msk [vmem:[%s7] sm:$0xff] %vm226, %v225
  // Predicated region
  $region30: #{ddpg_actor_forward.1} parent=0 // pred_check
    _
  $region31: #{ddpg_actor_forward.1} parent=0 // pred_check_branch
    %229 = sbr.rel (0) target = $region33
  $region32: #{ddpg_actor_forward.1} parent=0 // pred_region
    _
  $region33: #{ddpg_actor_forward.1} parent=0 // pred_fallthru
    _
  // Predicated region
  $region34: #{ddpg_actor_forward.1} parent=0 // pred_check
    _
  $region35: #{ddpg_actor_forward.1} parent=0 // pred_check_branch
    %231 = sbr.rel (0) target = $region37
  $region36: #{ddpg_actor_forward.1} parent=0 // pred_region
    _
  $region37: #{ddpg_actor_forward.1} parent=0 // pred_fallthru
    _

</llo_original>
